<compile_context>
chip_gen: v7x
topology: tpu7x:2x2x1
jax: 0.10.0
libtpu: 0.0.40
codegen_flags: <defaults>
</compile_context>

<pallas_src>
import functools

import jax
import jax.numpy as jnp
from jax import lax
from jax.experimental import pallas as pl
from jax.experimental.pallas import tpu as pltpu


def _round_up(x, m):
    return ((x + m - 1) // m) * m


def _vmem_capacity_bytes():
    """Per-core VMEM capacity (generation-aware); conservative fallback."""
    try:
        cap = int(pltpu.get_tpu_info().vmem_capacity_bytes)
        if cap > 0:
            return cap
    except Exception:
        pass
    return 64 * 1024 * 1024  # v7x per-TC size: safe lower bound everywhere


def _choose_tiles(m, n, d_pad, mask_elem_bytes, budget_bytes):
    """Pick (tm, tk) so the double-buffered working set fits the VMEM budget.

    Priority: largest tm first (contrast HBM traffic is (M/tm)*N*D*2 bytes, so
    bigger tm directly cuts re-streaming), then largest tk (amortizes the
    ~0.35 us per-step overhead).
    """
    tm_cap = _round_up(max(min(m, 1024), 32), 32)     # 32: int8/bf16 sublane packing
    tk_cap = _round_up(max(min(n, 1024), 128), 128)   # 128: lane width
    tm_opts = sorted({t for t in (1024, 512, 256, 128, 64, 32) if t < tm_cap}
                     | {tm_cap}, reverse=True)
    tk_opts = sorted({t for t in (1024, 512, 256, 128) if t < tk_cap}
                     | {tk_cap}, reverse=True)

    def working_set(tm, tk):
        b = 2 * tm * d_pad * 2          # anchor tile, bf16, double-buffered
        b += 2 * tk * d_pad * 2         # contrast tile, bf16, double-buffered
        b += 2 * tm * 128 * 4           # lane-dense f32 output tile
        b += 4 * tm * 4                 # running-stat scratch (m, l, s, cnt)
        if mask_elem_bytes:
            b += 2 * tm * tk * mask_elem_bytes   # streamed int8 mask tile
        else:
            b += 2 * (tm + tk) * 4               # label vectors
        return b

    for tm in tm_opts:
        for tk in tk_opts:
            if working_set(tm, tk) <= budget_bytes:
                return tm, tk
    return tm_opts[-1], tk_opts[-1]


def _pad2d(x, rows, cols):
    r, c = x.shape
    if r == rows and c == cols:
        return x
    return jnp.pad(x, ((0, rows - r), (0, cols - c)))


def _online_step(pair_f32, a_ref, c_ref, o_ref, m_sc, l_sc, s_sc, cnt_sc,
                 *, loss_scale, n_valid, n_pad_cols):
    """One (row_tile, col_tile) step of the online masked-softmax accumulation."""
    i = pl.program_id(0)            # anchor-row tile (parallel)
    j = pl.program_id(1)            # contrast-column tile (accumulated)
    tm = a_ref.shape[0]
    tk = c_ref.shape[1]

    @pl.when(j == 0)
    def _init():
        m_sc[...] = jnp.full_like(m_sc, -jnp.inf)
        l_sc[...] = jnp.zeros_like(l_sc)
        s_sc[...] = jnp.zeros_like(s_sc)
        cnt_sc[...] = jnp.zeros_like(cnt_sc)

    # Anchor is already scaled by 1/temperature (wrapper) and contrast is
    # pre-transposed to [d_pad, tk]: canonical MXU [m,k]x[k,n], f32 accumulate.
    logits = jnp.dot(a_ref[...], c_ref[...], preferred_element_type=jnp.float32)

    def _update(pos, keep_f):
        m_prev = m_sc[...]
        m_new = jnp.maximum(m_prev, jnp.max(logits, axis=1, keepdims=True))
        e = jnp.exp(logits - m_new)
        if keep_f is not None:
            e = e * keep_f
        l_sc[...] = l_sc[...] * jnp.exp(m_prev - m_new) + jnp.sum(
            e, axis=1, keepdims=True)
        m_sc[...] = m_new
        s_sc[...] = s_sc[...] + jnp.sum(pos * logits, axis=1, keepdims=True)
        cnt_sc[...] = cnt_sc[...] + jnp.sum(pos, axis=1, keepdims=True)

    # Diagonal self-exclusion / padded-column masking only on the tiles that
    # actually need it; interior tiles skip the iotas, compares and keep muls.
    row_start = i * tm
    col_start = j * tk
    diag_overlap = jnp.logical_and(row_start < col_start + tk,
                                   col_start < row_start + tm)
    has_tail = n_valid < n_pad_cols       # static python bool
    if has_tail:
        need_mask = jnp.logical_or(diag_overlap, j == pl.num_programs(1) - 1)
    else:
        need_mask = diag_overlap

    @pl.when(need_mask)
    def _edge_tile():
        row_idx = row_start + lax.broadcasted_iota(jnp.int32, (tm, tk), 0)
        col_idx = col_start + lax.broadcasted_iota(jnp.int32, (tm, tk), 1)
        keep = row_idx != col_idx
        if has_tail:
            keep = jnp.logical_and(keep, col_idx < n_valid)
        keep_f = keep.astype(jnp.float32)
        _update(pair_f32 * keep_f, keep_f)

    @pl.when(jnp.logical_not(need_mask))
    def _interior_tile():
        _update(pair_f32, None)

    @pl.when(j == pl.num_programs(1) - 1)
    def _finalize():
        cnt = cnt_sc[...]
        # sum(mask*log_prob) = s - cnt*(m + log l). Exact divide: this runs
        # once per row tile so it is effectively free.
        # NOTE: rows with zero positives give 0/0 -> NaN, matching the PyTorch
        # original's behavior; padded rows are sliced away before the mean.
        mean_log_prob_pos = (s_sc[...]
                             - cnt * (m_sc[...] + jnp.log(l_sc[...]))) / cnt
        loss = loss_scale * mean_log_prob_pos                       # [tm, 1]
        o_ref[...] = jnp.broadcast_to(loss, o_ref.shape).astype(o_ref.dtype)


def _conloss_labels_kernel(rlab_ref, clab_ref, a_ref, c_ref, o_ref,
                           m_sc, l_sc, s_sc, cnt_sc, **statics):
    # (tm, 1) == (1, tk) broadcasts inside the compare: no explicit
    # broadcast_to temporaries, no N x N mask in HBM.
    pair = (rlab_ref[...] == clab_ref[...]).astype(jnp.float32)
    _online_step(pair, a_ref, c_ref, o_ref, m_sc, l_sc, s_sc, cnt_sc, **statics)


def _conloss_mask_kernel(mask_ref, a_ref, c_ref, o_ref,
                         m_sc, l_sc, s_sc, cnt_sc, **statics):
    # User mask streamed as int8 (binary per spec); cast to f32 in-kernel.
    _online_step(mask_ref[...].astype(jnp.float32), a_ref, c_ref, o_ref,
                 m_sc, l_sc, s_sc, cnt_sc, **statics)


def con_loss(features, labels=None, mask=None, *, temperature=0.07,
             contrast_mode="all", base_temperature=0.07,
             supcon_s=False, selfcon_s_FG=False, selfcon_m_FG=False):
    """Pallas TPU implementation of ConLoss.forward (default flag path)."""
    if supcon_s or selfcon_s_FG or selfcon_m_FG:
        # TODO(synk): supcon_s / selfcon_{s,m}_FG branches (data-dependent row
        # filtering and F/G anchor splits) are not ported to the Pallas kernel.
        raise NotImplementedError("supcon_s / selfcon_* paths are not implemented")

    features = jnp.asarray(features)
    if features.ndim < 3:
        raise ValueError("`features` needs to be [bsz, n_views, ...], >=3 dims")
    if features.ndim > 3:
        features = features.reshape(features.shape[0], features.shape[1], -1)
    bsz, n_views, d = features.shape

    # ---- positive-pair definition (labels fast path avoids any N x N mask) --
    use_labels = True
    base_labels = None
    base_mask = None
    if labels is not None and mask is not None:
        raise ValueError("Cannot define both `labels` and `mask`")
    elif labels is None and mask is None:
        base_labels = jnp.arange(bsz, dtype=jnp.int32)   # eye(bsz) == index equality
    elif labels is not None:
        labels = jnp.asarray(labels).reshape(-1)
        if labels.shape[0] != bsz:
            raise ValueError("Num of labels does not match num of features")
        base_labels = labels.astype(jnp.int32)
    else:
        use_labels = False
        base_mask = jnp.asarray(mask)

    # contrast_feature = cat(unbind(features, 1), 0): row = view * bsz + b
    contrast = jnp.transpose(features, (1, 0, 2)).reshape(n_views * bsz, d)
    n = n_views * bsz
    if contrast_mode == "one":
        anchor = features[:, 0]
        m = bsz
    elif contrast_mode == "all":
        anchor = contrast
        m = n
    else:
        raise ValueError(f"Unknown mode: {contrast_mode}")

    d_pad = _round_up(d, 128)            # MXU contraction dim padded to lanes
    mask_elem_bytes = 0 if use_labels else 1

    vmem_cap = _vmem_capacity_bytes()
    tm, tk = _choose_tiles(m, n, d_pad, mask_elem_bytes,
                           budget_bytes=vmem_cap // 2)
    m_pad = _round_up(m, tm)
    n_pad = _round_up(n, tk)

    inv_temp = 1.0 / float(temperature)
    # Fold 1/temperature into the anchor ONCE here (f32 mul, single bf16
    # rounding) instead of re-scaling inside every grid step.
    anchor_p = _pad2d(anchor.astype(jnp.float32) * inv_temp, m_pad, d_pad
                      ).astype(jnp.bfloat16)
    # Pre-transpose contrast to [d, n]: the kernel streams lane-dense
    # [d_pad, tk] tiles and the matmul is a standard MXU contraction.
    contrast_p = _pad2d(contrast.astype(jnp.float32).T, d_pad, n_pad
                        ).astype(jnp.bfloat16)

    statics = dict(
        loss_scale=-(float(temperature) / float(base_temperature)),
        n_valid=n,
        n_pad_cols=n_pad,
    )

    if use_labels:
        col_labels = jnp.tile(base_labels, (n_views,))                 # [n]
        row_labels = col_labels if contrast_mode == "all" else base_labels
        row_lab = jnp.pad(row_labels, (0, m_pad - row_labels.shape[0])
                          ).reshape(m_pad, 1)
        col_lab = jnp.pad(col_labels, (0, n_pad - n)).reshape(1, n_pad)
        kernel = functools.partial(_conloss_labels_kernel, **statics)
        extra_inputs = (row_lab, col_lab)
        extra_specs = [
            pl.BlockSpec((tm, 1), lambda i, j: (i, 0)),
            pl.BlockSpec((1, tk), lambda i, j: (0, j)),
        ]
    else:
        reps = (n_views, n_views) if contrast_mode == "all" else (1, n_views)
        # Contrastive mask is binary per the module spec -> int8 streaming
        # (4x less DMA than f32 tiles).
        mask_tiled = _pad2d(jnp.tile(base_mask, reps).astype(jnp.int8),
                            m_pad, n_pad)
        kernel = functools.partial(_conloss_mask_kernel, **statics)
        extra_inputs = (mask_tiled,)
        extra_specs = [pl.BlockSpec((tm, tk), lambda i, j: (i, j))]

    per_anchor = pl.pallas_call(
        kernel,
        out_shape=jax.ShapeDtypeStruct((m_pad, 128), jnp.float32),
        grid_spec=pltpu.PrefetchScalarGridSpec(
            num_scalar_prefetch=0,
            grid=(m_pad // tm, n_pad // tk),
            in_specs=extra_specs + [
                pl.BlockSpec((tm, d_pad), lambda i, j: (i, 0)),  # anchor (resident over j)
                pl.BlockSpec((d_pad, tk), lambda i, j: (0, j)),  # contrast^T (streamed)
            ],
            out_specs=pl.BlockSpec((tm, 128), lambda i, j: (i, 0)),
            scratch_shapes=[pltpu.VMEM((tm, 1), jnp.float32)] * 4,  # m, l, s, cnt
        ),
        compiler_params=pltpu.CompilerParams(
            dimension_semantics=("parallel", "arbitrary"),
            vmem_limit_bytes=int(vmem_cap * 3 // 4),
        ),
    )(*extra_inputs, anchor_p, contrast_p)

    # loss.view(anchor_count, batch_size).mean() == mean over the m real anchors
    return jnp.mean(per_anchor[:m, 0])


def _con_loss_ref(features, labels=None, mask=None, temperature=0.07,
                  base_temperature=0.07):
    """Pure-JAX reference (mirrors the PyTorch forward, contrast_mode='all')."""
    bsz, n_views, d = features.shape
    if labels is None and mask is None:
        mask = jnp.eye(bsz, dtype=jnp.float32)
    elif labels is not None:
        labels = labels.reshape(-1, 1)
        mask = (labels == labels.T).astype(jnp.float32)
    else:
        mask = mask.astype(jnp.float32)
    n = n_views * bsz
    cf = jnp.transpose(features, (1, 0, 2)).reshape(n, d).astype(jnp.float32)
    adc = (cf @ cf.T) / temperature
    logits = adc - jnp.max(adc, axis=1, keepdims=True)
    mask = jnp.tile(mask, (n_views, n_views))
    logits_mask = 1.0 - jnp.eye(n, dtype=jnp.float32)
    mask = mask * logits_mask
    exp_logits = jnp.exp(logits) * logits_mask
    log_prob = logits - jnp.log(jnp.sum(exp_logits, axis=1, keepdims=True))
    mlpp = jnp.sum(mask * log_prob, axis=1) / jnp.sum(mask, axis=1)
    return jnp.mean(-(temperature / base_temperature) * mlpp)


if __name__ == "__main__":
    key = jax.random.PRNGKey(0)
    bsz, n_views, d = 8, 2, 32

    k1, k2 = jax.random.split(key)
    feats = jax.random.normal(k1, (bsz, n_views, d), dtype=jnp.float32)
    feats = feats / jnp.linalg.norm(feats, axis=-1, keepdims=True)

    # Default path: labels=None, mask=None (SimCLR-style identity mask).
    loss = jax.block_until_ready(con_loss(feats))
    ref = _con_loss_ref(feats)
    assert jnp.isfinite(loss)
    assert jnp.allclose(loss, ref, rtol=5e-2, atol=5e-2), (loss, ref)

    # Supervised labels path (mask built in-kernel from label equality).
    labels = jax.random.randint(k2, (bsz,), 0, 3)
    loss_sup = jax.block_until_ready(con_loss(feats, labels=labels))
    ref_sup = _con_loss_ref(feats, labels=labels)
    assert jnp.isfinite(loss_sup)
    assert jnp.allclose(loss_sup, ref_sup, rtol=5e-2, atol=5e-2), (loss_sup, ref_sup)

    # Explicit-mask path (streams int8 mask tiles); equivalent to labels path.
    mask = (labels.reshape(-1, 1) == labels.reshape(1, -1)).astype(jnp.float32)
    loss_mask = jax.block_until_ready(con_loss(feats, mask=mask))
    assert jnp.isfinite(loss_mask)
    assert jnp.allclose(loss_mask, loss_sup, rtol=1e-3, atol=1e-3), (loss_mask, loss_sup)

    print("KERNEL_OK")
</pallas_src>

<mosaic_0001>
module attributes {stable_mosaic.version = 11 : i64} {
  func.func @_conloss_labels_kernel(%arg0: i32, %arg1: i32, %arg2: memref<32x1xi32, #tpu.memory_space<vmem>>, %arg3: memref<1x128xi32, #tpu.memory_space<vmem>>, %arg4: memref<32x128xbf16, #tpu.memory_space<vmem>>, %arg5: memref<128x128xbf16, #tpu.memory_space<vmem>>, %arg6: memref<32x128xf32, #tpu.memory_space<vmem>>, %arg7: memref<32x1xf32, #tpu.memory_space<vmem>>, %arg8: memref<32x1xf32, #tpu.memory_space<vmem>>, %arg9: memref<32x1xf32, #tpu.memory_space<vmem>>, %arg10: memref<32x1xf32, #tpu.memory_space<vmem>>) attributes {dimension_semantics = [#tpu.dimension_semantics<parallel>, #tpu.dimension_semantics<arbitrary>], iteration_bounds = array<i64: 1, 1>, scalar_prefetch = 0 : i64, scratch_operands = 4 : i64, tpu.core_type = #tpu.core_type<tc>, window_params = [{transform_indices = @transform_0, window_bounds = array<i64: 32, 1>}, {transform_indices = @transform_1, window_bounds = array<i64: 1, 128>}, {transform_indices = @transform_2, window_bounds = array<i64: 32, 128>}, {transform_indices = @transform_3, window_bounds = array<i64: 128, 128>}, {transform_indices = @transform_4, window_bounds = array<i64: 32, 128>}]} {
    %c0 = arith.constant 0 : index
    %c0_0 = arith.constant 0 : index
    %0 = vector.load %arg2[%c0, %c0_0] : memref<32x1xi32, #tpu.memory_space<vmem>>, vector<32x1xi32>
    %c0_1 = arith.constant 0 : index
    %c0_2 = arith.constant 0 : index
    %1 = vector.load %arg3[%c0_1, %c0_2] : memref<1x128xi32, #tpu.memory_space<vmem>>, vector<1x128xi32>
    %2 = vector.broadcast %0 : vector<32x1xi32> to vector<32x128xi32>
    %3 = vector.broadcast %1 : vector<1x128xi32> to vector<32x128xi32>
    %4 = arith.cmpi eq, %2, %3 : vector<32x128xi32>
    %5 = arith.extui %4 : vector<32x128xi1> to vector<32x128xi32>
    %6 = arith.sitofp %5 : vector<32x128xi32> to vector<32x128xf32>
    %c0_i32 = arith.constant 0 : i32
    %7 = arith.cmpi eq, %arg1, %c0_i32 : i32
    %8 = arith.extui %7 : i1 to i32
    %c0_i32_3 = arith.constant 0 : i32
    %9 = arith.cmpi ne, %8, %c0_i32_3 : i32
    scf.if %9 {
      %cst_15 = arith.constant 0xFF800000 : f32
      %30 = vector.broadcast %cst_15 : f32 to vector<32x1xf32>
      %c0_16 = arith.constant 0 : index
      %c0_17 = arith.constant 0 : index
      %31 = vector.load %arg7[%c0_16, %c0_17] : memref<32x1xf32, #tpu.memory_space<vmem>>, vector<32x1xf32>
      tpu.vector_store %arg7[%c0_16, %c0_17], %30 {strides = array<i32>} : memref<32x1xf32, #tpu.memory_space<vmem>>, vector<32x1xf32>,
      %cst_18 = arith.constant 0.000000e+00 : f32
      %32 = vector.broadcast %cst_18 : f32 to vector<32x1xf32>
      %c0_19 = arith.constant 0 : index
      %c0_20 = arith.constant 0 : index
      %33 = vector.load %arg8[%c0_19, %c0_20] : memref<32x1xf32, #tpu.memory_space<vmem>>, vector<32x1xf32>
      tpu.vector_store %arg8[%c0_19, %c0_20], %32 {strides = array<i32>} : memref<32x1xf32, #tpu.memory_space<vmem>>, vector<32x1xf32>,
      %cst_21 = arith.constant 0.000000e+00 : f32
      %34 = vector.broadcast %cst_21 : f32 to vector<32x1xf32>
      %c0_22 = arith.constant 0 : index
      %c0_23 = arith.constant 0 : index
      %35 = vector.load %arg9[%c0_22, %c0_23] : memref<32x1xf32, #tpu.memory_space<vmem>>, vector<32x1xf32>
      tpu.vector_store %arg9[%c0_22, %c0_23], %34 {strides = array<i32>} : memref<32x1xf32, #tpu.memory_space<vmem>>, vector<32x1xf32>,
      %cst_24 = arith.constant 0.000000e+00 : f32
      %36 = vector.broadcast %cst_24 : f32 to vector<32x1xf32>
      %c0_25 = arith.constant 0 : index
      %c0_26 = arith.constant 0 : index
      %37 = vector.load %arg10[%c0_25, %c0_26] : memref<32x1xf32, #tpu.memory_space<vmem>>, vector<32x1xf32>
      tpu.vector_store %arg10[%c0_25, %c0_26], %36 {strides = array<i32>} : memref<32x1xf32, #tpu.memory_space<vmem>>, vector<32x1xf32>,
    } else {
    }
    %c0_4 = arith.constant 0 : index
    %c0_5 = arith.constant 0 : index
    %10 = vector.load %arg4[%c0_4, %c0_5] : memref<32x128xbf16, #tpu.memory_space<vmem>>, vector<32x128xbf16>
    %c0_6 = arith.constant 0 : index
    %c0_7 = arith.constant 0 : index
    %11 = vector.load %arg5[%c0_6, %c0_7] : memref<128x128xbf16, #tpu.memory_space<vmem>>, vector<128x128xbf16>
    %cst = arith.constant dense<0.000000e+00> : vector<32x128xf32>
    %12 = tpu.matmul %10, %11, %cst {dimension_numbers = #tpu.dot_dimension_numbers<[1], [0], [0], [1], [0, 0, 1, 1], [], []>} : vector<32x128xbf16>, vector<128x128xbf16>, vector<32x128xf32> -> vector<32x128xf32>
    %c32_i32 = arith.constant 32 : i32
    %13 = arith.muli %arg0, %c32_i32 : i32
    %c128_i32 = arith.constant 128 : i32
    %14 = arith.muli %arg1, %c128_i32 : i32
    %c128_i32_8 = arith.constant 128 : i32
    %15 = arith.addi %14, %c128_i32_8 : i32
    %16 = arith.cmpi slt, %13, %15 : i32
    %c32_i32_9 = arith.constant 32 : i32
    %17 = arith.addi %13, %c32_i32_9 : i32
    %18 = arith.cmpi slt, %14, %17 : i32
    %19 = arith.andi %16, %18 : i1
    %c0_i32_10 = arith.constant 0 : i32
    %20 = arith.cmpi eq, %arg1, %c0_i32_10 : i32
    %21 = arith.ori %19, %20 : i1
    %22 = arith.extui %21 : i1 to i32
    %c0_i32_11 = arith.constant 0 : i32
    %23 = arith.cmpi ne, %22, %c0_i32_11 : i32
    scf.if %23 {
      %30 = tpu.iota {dimensions = array<i32: 0>} : vector<32x128xi32>
      %31 = vector.broadcast %13 : i32 to vector<32x128xi32>
      %32 = arith.addi %31, %30 : vector<32x128xi32>
      %33 = tpu.iota {dimensions = array<i32: 1>} : vector<32x128xi32>
      %34 = vector.broadcast %14 : i32 to vector<32x128xi32>
      %35 = arith.addi %34, %33 : vector<32x128xi32>
      %36 = arith.cmpi ne, %32, %35 : vector<32x128xi32>
      %c16_i32 = arith.constant 16 : i32
      %37 = vector.broadcast %c16_i32 : i32 to vector<32x128xi32>
      %38 = arith.cmpi slt, %35, %37 : vector<32x128xi32>
      %39 = arith.andi %36, %38 : vector<32x128xi1>
      %40 = arith.extui %39 : vector<32x128xi1> to vector<32x128xi32>
      %41 = arith.sitofp %40 : vector<32x128xi32> to vector<32x128xf32>
      %42 = arith.mulf %6, %41 : vector<32x128xf32>
      %c0_15 = arith.constant 0 : index
      %c0_16 = arith.constant 0 : index
      %43 = vector.load %arg7[%c0_15, %c0_16] : memref<32x1xf32, #tpu.memory_space<vmem>>, vector<32x1xf32>
      %cst_17 = arith.constant dense<0xFF800000> : vector<32xf32>
      %44 = vector.multi_reduction <maximumf>, %12, %cst_17 [1] : vector<32x128xf32> to vector<32xf32>
      %45 = vector.shape_cast %44 : vector<32xf32> to vector<32x1xf32>
      %46 = arith.maximumf %43, %45 : vector<32x1xf32>
      %47 = vector.broadcast %46 : vector<32x1xf32> to vector<32x128xf32>
      %48 = arith.subf %12, %47 : vector<32x128xf32>
      %49 = math.exp %48 : vector<32x128xf32>
      %50 = arith.mulf %49, %41 : vector<32x128xf32>
      %c0_18 = arith.constant 0 : index
      %c0_19 = arith.constant 0 : index
      %51 = vector.load %arg8[%c0_18, %c0_19] : memref<32x1xf32, #tpu.memory_space<vmem>>, vector<32x1xf32>
      %52 = arith.subf %43, %46 : vector<32x1xf32>
      %53 = math.exp %52 : vector<32x1xf32>
      %54 = arith.mulf %51, %53 : vector<32x1xf32>
      %cst_20 = arith.constant dense<0.000000e+00> : vector<32xf32>
      %55 = vector.multi_reduction <add>, %50, %cst_20 [1] : vector<32x128xf32> to vector<32xf32>
      %56 = vector.shape_cast %55 : vector<32xf32> to vector<32x1xf32>
      %57 = arith.addf %54, %56 : vector<32x1xf32>
      %c0_21 = arith.constant 0 : index
      %c0_22 = arith.constant 0 : index
      %58 = vector.load %arg8[%c0_21, %c0_22] : memref<32x1xf32, #tpu.memory_space<vmem>>, vector<32x1xf32>
      tpu.vector_store %arg8[%c0_21, %c0_22], %57 {strides = array<i32>} : memref<32x1xf32, #tpu.memory_space<vmem>>, vector<32x1xf32>,
      %c0_23 = arith.constant 0 : index
      %c0_24 = arith.constant 0 : index
      %59 = vector.load %arg7[%c0_23, %c0_24] : memref<32x1xf32, #tpu.memory_space<vmem>>, vector<32x1xf32>
      tpu.vector_store %arg7[%c0_23, %c0_24], %46 {strides = array<i32>} : memref<32x1xf32, #tpu.memory_space<vmem>>, vector<32x1xf32>,
      %c0_25 = arith.constant 0 : index
      %c0_26 = arith.constant 0 : index
      %60 = vector.load %arg9[%c0_25, %c0_26] : memref<32x1xf32, #tpu.memory_space<vmem>>, vector<32x1xf32>
      %61 = arith.mulf %42, %12 : vector<32x128xf32>
      %cst_27 = arith.constant dense<0.000000e+00> : vector<32xf32>
      %62 = vector.multi_reduction <add>, %61, %cst_27 [1] : vector<32x128xf32> to vector<32xf32>
      %63 = vector.shape_cast %62 : vector<32xf32> to vector<32x1xf32>
      %64 = arith.addf %60, %63 : vector<32x1xf32>
      %c0_28 = arith.constant 0 : index
      %c0_29 = arith.constant 0 : index
      %65 = vector.load %arg9[%c0_28, %c0_29] : memref<32x1xf32, #tpu.memory_space<vmem>>, vector<32x1xf32>
      tpu.vector_store %arg9[%c0_28, %c0_29], %64 {strides = array<i32>} : memref<32x1xf32, #tpu.memory_space<vmem>>, vector<32x1xf32>,
      %c0_30 = arith.constant 0 : index
      %c0_31 = arith.constant 0 : index
      %66 = vector.load %arg10[%c0_30, %c0_31] : memref<32x1xf32, #tpu.memory_space<vmem>>, vector<32x1xf32>
      %cst_32 = arith.constant dense<0.000000e+00> : vector<32xf32>
      %67 = vector.multi_reduction <add>, %42, %cst_32 [1] : vector<32x128xf32> to vector<32xf32>
      %68 = vector.shape_cast %67 : vector<32xf32> to vector<32x1xf32>
      %69 = arith.addf %66, %68 : vector<32x1xf32>
      %c0_33 = arith.constant 0 : index
      %c0_34 = arith.constant 0 : index
      %70 = vector.load %arg10[%c0_33, %c0_34] : memref<32x1xf32, #tpu.memory_space<vmem>>, vector<32x1xf32>
      tpu.vector_store %arg10[%c0_33, %c0_34], %69 {strides = array<i32>} : memref<32x1xf32, #tpu.memory_space<vmem>>, vector<32x1xf32>,
    } else {
    }
    %true = arith.constant true
    %24 = arith.xori %21, %true : i1
    %25 = arith.extui %24 : i1 to i32
    %c0_i32_12 = arith.constant 0 : i32
    %26 = arith.cmpi ne, %25, %c0_i32_12 : i32
    scf.if %26 {
      %c0_15 = arith.constant 0 : index
      %c0_16 = arith.constant 0 : index
      %30 = vector.load %arg7[%c0_15, %c0_16] : memref<32x1xf32, #tpu.memory_space<vmem>>, vector<32x1xf32>
      %cst_17 = arith.constant dense<0xFF800000> : vector<32xf32>
      %31 = vector.multi_reduction <maximumf>, %12, %cst_17 [1] : vector<32x128xf32> to vector<32xf32>
      %32 = vector.shape_cast %31 : vector<32xf32> to vector<32x1xf32>
      %33 = arith.maximumf %30, %32 : vector<32x1xf32>
      %34 = vector.broadcast %33 : vector<32x1xf32> to vector<32x128xf32>
      %35 = arith.subf %12, %34 : vector<32x128xf32>
      %36 = math.exp %35 : vector<32x128xf32>
      %c0_18 = arith.constant 0 : index
      %c0_19 = arith.constant 0 : index
      %37 = vector.load %arg8[%c0_18, %c0_19] : memref<32x1xf32, #tpu.memory_space<vmem>>, vector<32x1xf32>
      %38 = arith.subf %30, %33 : vector<32x1xf32>
      %39 = math.exp %38 : vector<32x1xf32>
      %40 = arith.mulf %37, %39 : vector<32x1xf32>
      %cst_20 = arith.constant dense<0.000000e+00> : vector<32xf32>
      %41 = vector.multi_reduction <add>, %36, %cst_20 [1] : vector<32x128xf32> to vector<32xf32>
      %42 = vector.shape_cast %41 : vector<32xf32> to vector<32x1xf32>
      %43 = arith.addf %40, %42 : vector<32x1xf32>
      %c0_21 = arith.constant 0 : index
      %c0_22 = arith.constant 0 : index
      %44 = vector.load %arg8[%c0_21, %c0_22] : memref<32x1xf32, #tpu.memory_space<vmem>>, vector<32x1xf32>
      tpu.vector_store %arg8[%c0_21, %c0_22], %43 {strides = array<i32>} : memref<32x1xf32, #tpu.memory_space<vmem>>, vector<32x1xf32>,
      %c0_23 = arith.constant 0 : index
      %c0_24 = arith.constant 0 : index
      %45 = vector.load %arg7[%c0_23, %c0_24] : memref<32x1xf32, #tpu.memory_space<vmem>>, vector<32x1xf32>
      tpu.vector_store %arg7[%c0_23, %c0_24], %33 {strides = array<i32>} : memref<32x1xf32, #tpu.memory_space<vmem>>, vector<32x1xf32>,
      %c0_25 = arith.constant 0 : index
      %c0_26 = arith.constant 0 : index
      %46 = vector.load %arg9[%c0_25, %c0_26] : memref<32x1xf32, #tpu.memory_space<vmem>>, vector<32x1xf32>
      %47 = arith.mulf %6, %12 : vector<32x128xf32>
      %cst_27 = arith.constant dense<0.000000e+00> : vector<32xf32>
      %48 = vector.multi_reduction <add>, %47, %cst_27 [1] : vector<32x128xf32> to vector<32xf32>
      %49 = vector.shape_cast %48 : vector<32xf32> to vector<32x1xf32>
      %50 = arith.addf %46, %49 : vector<32x1xf32>
      %c0_28 = arith.constant 0 : index
      %c0_29 = arith.constant 0 : index
      %51 = vector.load %arg9[%c0_28, %c0_29] : memref<32x1xf32, #tpu.memory_space<vmem>>, vector<32x1xf32>
      tpu.vector_store %arg9[%c0_28, %c0_29], %50 {strides = array<i32>} : memref<32x1xf32, #tpu.memory_space<vmem>>, vector<32x1xf32>,
      %c0_30 = arith.constant 0 : index
      %c0_31 = arith.constant 0 : index
      %52 = vector.load %arg10[%c0_30, %c0_31] : memref<32x1xf32, #tpu.memory_space<vmem>>, vector<32x1xf32>
      %cst_32 = arith.constant dense<0.000000e+00> : vector<32xf32>
      %53 = vector.multi_reduction <add>, %6, %cst_32 [1] : vector<32x128xf32> to vector<32xf32>
      %54 = vector.shape_cast %53 : vector<32xf32> to vector<32x1xf32>
      %55 = arith.addf %52, %54 : vector<32x1xf32>
      %c0_33 = arith.constant 0 : index
      %c0_34 = arith.constant 0 : index
      %56 = vector.load %arg10[%c0_33, %c0_34] : memref<32x1xf32, #tpu.memory_space<vmem>>, vector<32x1xf32>
      tpu.vector_store %arg10[%c0_33, %c0_34], %55 {strides = array<i32>} : memref<32x1xf32, #tpu.memory_space<vmem>>, vector<32x1xf32>,
    } else {
    }
    %c0_i32_13 = arith.constant 0 : i32
    %27 = arith.cmpi eq, %arg1, %c0_i32_13 : i32
    %28 = arith.extui %27 : i1 to i32
    %c0_i32_14 = arith.constant 0 : i32
    %29 = arith.cmpi ne, %28, %c0_i32_14 : i32
    scf.if %29 {
      %c0_15 = arith.constant 0 : index
      %c0_16 = arith.constant 0 : index
      %30 = vector.load %arg10[%c0_15, %c0_16] : memref<32x1xf32, #tpu.memory_space<vmem>>, vector<32x1xf32>
      %c0_17 = arith.constant 0 : index
      %c0_18 = arith.constant 0 : index
      %31 = vector.load %arg9[%c0_17, %c0_18] : memref<32x1xf32, #tpu.memory_space<vmem>>, vector<32x1xf32>
      %c0_19 = arith.constant 0 : index
      %c0_20 = arith.constant 0 : index
      %32 = vector.load %arg7[%c0_19, %c0_20] : memref<32x1xf32, #tpu.memory_space<vmem>>, vector<32x1xf32>
      %c0_21 = arith.constant 0 : index
      %c0_22 = arith.constant 0 : index
      %33 = vector.load %arg8[%c0_21, %c0_22] : memref<32x1xf32, #tpu.memory_space<vmem>>, vector<32x1xf32>
      %34 = math.log %33 : vector<32x1xf32>
      %35 = arith.addf %32, %34 : vector<32x1xf32>
      %36 = arith.mulf %30, %35 : vector<32x1xf32>
      %37 = arith.subf %31, %36 : vector<32x1xf32>
      %38 = arith.divf %37, %30 : vector<32x1xf32>
      %cst_23 = arith.constant -1.000000e+00 : f32
      %39 = vector.broadcast %cst_23 : f32 to vector<32x1xf32>
      %40 = arith.mulf %39, %38 : vector<32x1xf32>
      %41 = vector.shape_cast %40 : vector<32x1xf32> to vector<32x1xf32>
      %42 = vector.broadcast %41 : vector<32x1xf32> to vector<32x128xf32>
      %c0_24 = arith.constant 0 : index
      %c0_25 = arith.constant 0 : index
      %43 = vector.load %arg6[%c0_24, %c0_25] : memref<32x128xf32, #tpu.memory_space<vmem>>, vector<32x128xf32>
      tpu.vector_store %arg6[%c0_24, %c0_25], %42 {strides = array<i32>} : memref<32x128xf32, #tpu.memory_space<vmem>>, vector<32x128xf32>,
    } else {
    }
    return
  }
  func.func @transform_0(%arg0: i32, %arg1: i32) -> (i32, i32) {
    %c0_i32 = arith.constant 0 : i32
    %c0_i32_0 = arith.constant 0 : i32
    return %arg0, %c0_i32 : i32, i32
  }
  func.func @transform_1(%arg0: i32, %arg1: i32) -> (i32, i32) {
    %c0_i32 = arith.constant 0 : i32
    %c0_i32_0 = arith.constant 0 : i32
    return %c0_i32, %arg1 : i32, i32
  }
  func.func @transform_2(%arg0: i32, %arg1: i32) -> (i32, i32) {
    %c0_i32 = arith.constant 0 : i32
    %c0_i32_0 = arith.constant 0 : i32
    return %arg0, %c0_i32 : i32, i32
  }
  func.func @transform_3(%arg0: i32, %arg1: i32) -> (i32, i32) {
    %c0_i32 = arith.constant 0 : i32
    %c0_i32_0 = arith.constant 0 : i32
    return %c0_i32, %arg1 : i32, i32
  }
  func.func @transform_4(%arg0: i32, %arg1: i32) -> (i32, i32) {
    %c0_i32 = arith.constant 0 : i32
    %c0_i32_0 = arith.constant 0 : i32
    return %arg0, %c0_i32 : i32, i32
  }
}

</mosaic_0001>

<llo_original>
// kernel: tpu_custom_call.1
$region0: #{tpu_custom_call.1}
  #allocation0 [shape = 'u32[]', space=smem, size = 0x4, offset = 0x4, fixed_abs, tag = 'smem constant byte address 0x4 - core index']
  #allocation1 [shape = 'u32[144,128]{1,0:T(1,128)}', space=vmem, size = 0x12000, scoped, tag = 'internal scratch']
  #allocation2 [shape = 'f32[32,1]{1,0:T(8,128)}', space=vmem, size = 0x4000, scoped, tag = 'scratch operand']
  #allocation3 [shape = 'f32[32,1]{1,0:T(8,128)}', space=vmem, size = 0x4000, scoped, tag = 'scratch operand']
  #allocation4 [shape = 'f32[32,1]{1,0:T(8,128)}', space=vmem, size = 0x4000, scoped, tag = 'scratch operand']
  #allocation5 [shape = 'f32[32,1]{1,0:T(8,128)}', space=vmem, size = 0x4000, scoped, tag = 'scratch operand']
  %s0 = inlined_call_operand.vmem [shape: s32[32,1], index: 0, kind: input, shape index: {}]
  %s1 = inlined_call_operand.vmem [shape: s32[1,128], index: 1, kind: input, shape index: {}]
  %s2 = inlined_call_operand.vmem [shape: bf16[32,128], index: 2, kind: input, shape index: {}]
  %s3 = inlined_call_operand.hbm [shape: bf16[128,128], index: 3, kind: input, shape index: {}]
  %s4 = inlined_call_operand.hbm [shape: f32[32,128], index: 4, kind: output, shape index: {}]
  %s5 = sld [smem:[#allocation0]]
  $region46: #{tpu_custom_call.1} parent=0
    _
  %s7 = ssub.s32 1, %s5
  %s8 = scalar_select 0, %s7, %s5
  $region1: #{tpu_custom_call.1} parent=0
    #allocation6 [shape = 'u8[32768]{0}', space=vmem, size = 0x8000, scoped, tag = 'input window, operand 3, single buffered']
    #allocation7 [shape = 's32[1]{0}', space=sflag, size = 0x4, scoped, tag = 'scoped memory for tpu_custom_call.1']
    #allocation8 [shape = 's32[1]{0}', space=sflag, size = 0x4, scoped, tag = 'scoped memory for tpu_custom_call.1']
    #allocation9 [shape = 'u8[16384]{0}', space=vmem, size = 0x4000, scoped, tag = 'output window, operand 0, single buffered']
    %9 = vsyncpa [#allocation7], 0
    %10 = vsyncpa [#allocation8], 0
    // Predicated region
    $region2: #{tpu_custom_call.1} parent=1 // pred_check
      _
    $region3: #{tpu_custom_call.1} parent=1 // pred_check_branch
      %12 = sbr.rel (0) target = $region5
    $region4: #{tpu_custom_call.1} parent=1 // pred_region
      _
    $region5: #{tpu_custom_call.1} parent=1 // pred_fallthru
      _
    // Predicated region
    $region6: #{tpu_custom_call.1} parent=1 // pred_check
      _
    $region7: #{tpu_custom_call.1} parent=1 // pred_check_branch
      %14 = sbr.rel (0) target = $region9
    $region8: #{tpu_custom_call.1} parent=1 // pred_region
      _
    $region9: #{tpu_custom_call.1} parent=1 // pred_fallthru
      _
    // Predicated region
    $region10: #{tpu_custom_call.1} parent=1 // pred_check
      _
    $region11: #{tpu_custom_call.1} parent=1 // pred_check_branch
      %16 = sbr.rel (0) target = $region13
    $region12: #{tpu_custom_call.1} parent=1 // pred_region
      _
    $region13: #{tpu_custom_call.1} parent=1 // pred_fallthru
      _
    // Predicated region
    $region14: #{tpu_custom_call.1} parent=1 // pred_check
      _
    $region15: #{tpu_custom_call.1} parent=1 // pred_check_branch
      %18 = sbr.rel (0) target = $region17
    $region16: #{tpu_custom_call.1} parent=1 // pred_region
      %s20 = ssub.s32 1024, 1024
      %21 = vsyncadd [#allocation7], %s20
      %s22 = sshll.u32 [#allocation6], 4
      %s23 = int_to_ptr.vmem [resolvable:$true] %s22
      %28 = dma.hbm_to_vmem [thread:$0]  %s3, 1024, %s23, [#allocation7], 64, 64, 4
    $region17: #{tpu_custom_call.1} parent=1 // pred_fallthru
      _
    // Predicated region
    $region18: #{tpu_custom_call.1} parent=1 // pred_check
      _
    $region19: #{tpu_custom_call.1} parent=1 // pred_check_branch
      %30 = sbr.rel (0) target = $region21
    $region20: #{tpu_custom_call.1} parent=1 // pred_region
      %31 = dma.done [#allocation7], 1024
    $region21: #{tpu_custom_call.1} parent=1 // pred_fallthru
      _
    %v33 = vld [vmem:[%s0] sm:$0xff]
    %v34 = vld [vmem:[%s0 + $0x8] sm:$0xff]
    %v35 = vld [vmem:[%s0 + $0x10] sm:$0xff]
    %v36 = vld [vmem:[%s0 + $0x18] sm:$0xff]
    %v37 = vld [vmem:[%s1] sm:$0x1]
    %38 = vset.pattern.permute.xlu0 0
    %39 = vperm.xlu0 %38, %v33
    %v40 = vpop.permute.xlu0 %39
    %41 = vset.pattern.permute.xlu0 0
    %42 = vperm.xlu0 %41, %v34
    %v43 = vpop.permute.xlu0 %42
    %44 = vset.pattern.permute.xlu0 0
    %45 = vperm.xlu0 %44, %v35
    %v46 = vpop.permute.xlu0 %45
    %47 = vset.pattern.permute.xlu0 0
    %48 = vperm.xlu0 %47, %v36
    %v49 = vpop.permute.xlu0 %48
    %v50 = vlaneseq
    %v51 = vshrl.u32 %v50, 7
    %v52 = vsub.s32 0, %v51
    %v53 = vrot.slane %v37, %v52
    %vm54 = vcmp.eq.s32.totalorder %v40, %v53
    %vm55 = vcmp.eq.s32.totalorder %v43, %v53
    %vm56 = vcmp.eq.s32.totalorder %v46, %v53
    %vm57 = vcmp.eq.s32.totalorder %v49, %v53
    %v58 = vsel %vm54, 1, 0
    %v59 = vsel %vm55, 1, 0
    %v60 = vsel %vm56, 1, 0
    %v61 = vsel %vm57, 1, 0
    %v62 = vcvt.s32.f32 %v58
    %v63 = vcvt.s32.f32 %v59
    %v64 = vcvt.s32.f32 %v60
    %v65 = vcvt.s32.f32 %v61
    %p66 = scmp.eq.s32.totalorder 0, 0
    // Predicated region
    $region22: #{tpu_custom_call.1} parent=1 // pred_check
      %p67 = pneg %p66
    $region23: #{tpu_custom_call.1} parent=1 // pred_check_branch
      %69 = sbr.rel (%p67) target = $region25
    $region24: #{tpu_custom_call.1} parent=1 // pred_region
      %vm70 = vcmask 7168
      %71 = vst.msk [vmem:[#allocation2] sm:$0xff] %vm70, -inf
      %72 = vst.msk [vmem:[#allocation2 + $0x8] sm:$0xff] %vm70, -inf
      %73 = vst.msk [vmem:[#allocation2 + $0x10] sm:$0xff] %vm70, -inf
      %74 = vst.msk [vmem:[#allocation2 + $0x18] sm:$0xff] %vm70, -inf
      %75 = vst.msk [vmem:[#allocation3] sm:$0xff] %vm70, 0.0
      %76 = vst.msk [vmem:[#allocation3 + $0x8] sm:$0xff] %vm70, 0.0
      %77 = vst.msk [vmem:[#allocation3 + $0x10] sm:$0xff] %vm70, 0.0
      %78 = vst.msk [vmem:[#allocation3 + $0x18] sm:$0xff] %vm70, 0.0
      %79 = vst.msk [vmem:[#allocation4] sm:$0xff] %vm70, 0.0
      %80 = vst.msk [vmem:[#allocation4 + $0x8] sm:$0xff] %vm70, 0.0
      %81 = vst.msk [vmem:[#allocation4 + $0x10] sm:$0xff] %vm70, 0.0
      %82 = vst.msk [vmem:[#allocation4 + $0x18] sm:$0xff] %vm70, 0.0
      %83 = vst.msk [vmem:[#allocation5] sm:$0xff] %vm70, 0.0
      %84 = vst.msk [vmem:[#allocation5 + $0x8] sm:$0xff] %vm70, 0.0
      %85 = vst.msk [vmem:[#allocation5 + $0x10] sm:$0xff] %vm70, 0.0
      %86 = vst.msk [vmem:[#allocation5 + $0x18] sm:$0xff] %vm70, 0.0
    $region25: #{tpu_custom_call.1} parent=1 // pred_fallthru
      _
    %v87 = vld [vmem:[%s2] sm:$0xf]
    %v88 = vld [vmem:[%s2 + $0x4] sm:$0xf]
    %v89 = vld [vmem:[%s2 + $0x8] sm:$0xf]
    %v90 = vld [vmem:[%s2 + $0xc] sm:$0xf]
    %v91 = vld [vmem:[#allocation6] sm:$0xf]
    %v92 = vld [vmem:[#allocation6 + $0x4] sm:$0xf]
    %v93 = vld [vmem:[#allocation6 + $0x8] sm:$0xf]
    %v94 = vld [vmem:[#allocation6 + $0xc] sm:$0xf]
    %v95 = vld [vmem:[#allocation6 + $0x10] sm:$0xf]
    %v96 = vld [vmem:[#allocation6 + $0x14] sm:$0xf]
    %v97 = vld [vmem:[#allocation6 + $0x18] sm:$0xf]
    %v98 = vld [vmem:[#allocation6 + $0x1c] sm:$0xf]
    %v99 = vld [vmem:[#allocation6 + $0x20] sm:$0xf]
    %v100 = vld [vmem:[#allocation6 + $0x24] sm:$0xf]
    %v101 = vld [vmem:[#allocation6 + $0x28] sm:$0xf]
    %v102 = vld [vmem:[#allocation6 + $0x2c] sm:$0xf]
    %v103 = vld [vmem:[#allocation6 + $0x30] sm:$0xf]
    %v104 = vld [vmem:[#allocation6 + $0x34] sm:$0xf]
    %v105 = vld [vmem:[#allocation6 + $0x38] sm:$0xf]
    %v106 = vld [vmem:[#allocation6 + $0x3c] sm:$0xf]
    %v111 = vunpack.c.l.b16 %v87
    %v112 = vunpack.c.l.b16 %v88
    %v113 = vunpack.c.l.b16 %v89
    %v114 = vunpack.c.l.b16 %v90
    %v115 = vpack.c.b16 %v112, %v111
    %v116 = vpack.c.b16 %v114, %v113
    %v135 = vunpack.c.l.b16 %v91
    %v136 = vunpack.c.l.b16 %v92
    %v137 = vunpack.c.l.b16 %v93
    %v138 = vunpack.c.l.b16 %v94
    %v139 = vunpack.c.l.b16 %v95
    %v140 = vunpack.c.l.b16 %v96
    %v141 = vunpack.c.l.b16 %v97
    %v142 = vunpack.c.l.b16 %v98
    %v143 = vunpack.c.l.b16 %v99
    %v144 = vunpack.c.l.b16 %v100
    %v145 = vunpack.c.l.b16 %v101
    %v146 = vunpack.c.l.b16 %v102
    %v147 = vunpack.c.l.b16 %v103
    %v148 = vunpack.c.l.b16 %v104
    %v149 = vunpack.c.l.b16 %v105
    %v150 = vunpack.c.l.b16 %v106
    %v151 = vpack.c.b16 %v136, %v135
    %v152 = vpack.c.b16 %v138, %v137
    %v153 = vpack.c.b16 %v140, %v139
    %v154 = vpack.c.b16 %v142, %v141
    %v155 = vpack.c.b16 %v144, %v143
    %v156 = vpack.c.b16 %v146, %v145
    %v157 = vpack.c.b16 %v148, %v147
    %v158 = vpack.c.b16 %v150, %v149
    %167 = vmatprep.subr.bf16.mxu0 0
    %168 = vmatpush1.bf16.msra.mxu0 %v151
    %169 = vmatprep.subr.bf16.mxu0 0
    %170 = vmatpush1.bf16.msra.mxu0 %v152
    %171 = vmatprep.subr.bf16.mxu0 0
    %172 = vmatpush1.bf16.msra.mxu0 %v153
    %173 = vmatprep.subr.bf16.mxu0 0
    %174 = vmatpush1.bf16.msra.mxu0 %v154
    %175 = vmatprep.subr.bf16.mxu0 0
    %176 = vmatpush1.bf16.msra.mxu0 %v155
    %177 = vmatprep.subr.bf16.mxu0 0
    %178 = vmatpush1.bf16.msra.mxu0 %v156
    %179 = vmatprep.subr.bf16.mxu0 0
    %180 = vmatpush1.bf16.msra.mxu0 %v157
    %181 = vmatprep.subr.bf16.mxu0 0
    %182 = vmatpush1.bf16.msra.mxu0 %v158
    %183 = vmatprep.subr.bf16.mxu0 0
    %184 = vmatpush1.bf16.msra.mxu0 0
    %185 = vmatprep.subr.bf16.mxu0 0
    %186 = vmatpush1.bf16.msra.mxu0 0
    %187 = vmatprep.subr.bf16.mxu0 0
    %188 = vmatpush1.bf16.msra.mxu0 0
    %189 = vmatprep.subr.bf16.mxu0 0
    %190 = vmatpush1.bf16.msra.mxu0 0
    %191 = vmatprep.subr.bf16.mxu0 0
    %192 = vmatpush1.bf16.msra.mxu0 0
    %193 = vmatprep.subr.bf16.mxu0 0
    %194 = vmatpush1.bf16.msra.mxu0 0
    %195 = vmatprep.subr.bf16.mxu0 0
    %196 = vmatpush1.bf16.msra.mxu0 0
    %197 = vmatprep.subr.bf16.mxu0 0
    %198 = vmatpush1.bf16.msra.mxu0 0
    %199 = vmatprep.mubr.bf16.mxu0 0
    %200 = vmatmul.mubr.bf16.gmra.mrb[0].mxu0 %v115
    %v201 = vpop.f32.mrb[0].mxu0
    %v202 = vadd.f32 0.0, %v201
    %v203 = vpop.f32.mrb[0].mxu0
    %v204 = vpop.f32.mrb[0].mxu0
    %v205 = vadd.f32 0.0, %v204
    %v206 = vpop.f32.mrb[0].mxu0
    %207 = vmatprep.mubr.bf16.mxu0 0
    %208 = vmatmul.mubr.bf16.gmra.mrb[0].mxu0 %v116
    %v209 = vpop.f32.mrb[0].mxu0
    %v210 = vadd.f32 0.0, %v209
    %v211 = vpop.f32.mrb[0].mxu0
    %v212 = vpop.f32.mrb[0].mxu0
    %v213 = vadd.f32 0.0, %v212
    %v214 = vpop.f32.mrb[0].mxu0
    %215 = vdwg.mxu0
    %s216 = smul.u32 0, 32
    %s217 = smul.u32 0, 128
    %s218 = sadd.s32 %s217, 128
    %p219 = scmp.lt.s32.totalorder %s216, %s218
    %s220 = sadd.s32 %s216, 32
    %p221 = scmp.lt.s32.totalorder %s217, %s220
    %p222 = pnand %p219, %p221
    %p223 = pneg %p222
    %p224 = por %p223, %p66
    // Predicated region
    $region26: #{tpu_custom_call.1} parent=1 // pred_check
      %p225 = pneg %p224
    $region27: #{tpu_custom_call.1} parent=1 // pred_check_branch
      %227 = sbr.rel (%p225) target = $region29
    $region28: #{tpu_custom_call.1} parent=1 // pred_region
      %v228 = vlaneseq
      %v229 = vshrl.u32 %v228, 7
      %v230 = vadd.s32 %v229, 8
      %v231 = vadd.s32 %v229, 16
      %v232 = vadd.s32 %v229, 24
      %v233 = vstv %s216
      %v234 = vadd.s32 %v233, %v229
      %v235 = vadd.s32 %v233, %v230
      %v236 = vadd.s32 %v233, %v231
      %v237 = vadd.s32 %v233, %v232
      %v238 = vlaneseq
      %v239 = vand.u32 %v238, 127
      %v240 = vstv %s217
      %v241 = vadd.s32 %v240, %v239
      %vm242 = vcmp.ne.s32.totalorder %v234, %v241
      %vm243 = vcmp.ne.s32.totalorder %v235, %v241
      %vm244 = vcmp.ne.s32.totalorder %v236, %v241
      %vm245 = vcmp.ne.s32.totalorder %v237, %v241
      %vm246 = vcmp.lt.s32.totalorder %v241, 16
      %vm247 = vmand %vm242, %vm246
      %vm248 = vmand %vm243, %vm246
      %vm249 = vmand %vm244, %vm246
      %vm250 = vmand %vm245, %vm246
      %v251 = vsel %vm247, 1, 0
      %v252 = vsel %vm248, 1, 0
      %v253 = vsel %vm249, 1, 0
      %v254 = vsel %vm250, 1, 0
      %v255 = vcvt.s32.f32 %v251
      %v256 = vcvt.s32.f32 %v252
      %v257 = vcvt.s32.f32 %v253
      %v258 = vcvt.s32.f32 %v254
      %v259 = vmul.f32 %v62, %v255
      %v260 = vmul.f32 %v63, %v256
      %v261 = vmul.f32 %v64, %v257
      %v262 = vmul.f32 %v65, %v258
      %v263 = vld [vmem:[#allocation2] sm:$0xff]
      %v264 = vld [vmem:[#allocation2 + $0x8] sm:$0xff]
      %v265 = vld [vmem:[#allocation2 + $0x10] sm:$0xff]
      %v266 = vld [vmem:[#allocation2 + $0x18] sm:$0xff]
      %267 = vmax.xlane.f32.xlu0 %v202
      %v268 = vpop.xlane.xlu0 %267
      %269 = vmax.xlane.f32.xlu0 %v205
      %v270 = vpop.xlane.xlu0 %269
      %271 = vmax.xlane.f32.xlu0 %v210
      %v272 = vpop.xlane.xlu0 %271
      %273 = vmax.xlane.f32.xlu0 %v213
      %v274 = vpop.xlane.xlu0 %273
      %v275 = vmax.f32 %v263, %v268
      %v276 = vmax.f32 %v264, %v270
      %v277 = vmax.f32 %v265, %v272
      %v278 = vmax.f32 %v266, %v274
      %280 = vset.pattern.permute.xlu0 0
      %281 = vperm.xlu0 %280, %v275
      %v282 = vpop.permute.xlu0 %281
      %285 = vset.pattern.permute.xlu0 0
      %286 = vperm.xlu0 %285, %v276
      %v287 = vpop.permute.xlu0 %286
      %290 = vset.pattern.permute.xlu0 0
      %291 = vperm.xlu0 %290, %v277
      %v292 = vpop.permute.xlu0 %291
      %295 = vset.pattern.permute.xlu0 0
      %296 = vperm.xlu0 %295, %v278
      %v297 = vpop.permute.xlu0 %296
      %v299 = vsub.f32 %v202, %v282
      %v300 = vsub.f32 %v205, %v287
      %v301 = vsub.f32 %v210, %v292
      %v302 = vsub.f32 %v213, %v297
      %v303 = vmul.f32 %v299, 1.442695
      %v304 = vpow.pop %v303
      %v305 = vmul.f32 %v300, 1.442695
      %v306 = vpow.pop %v305
      %v307 = vmul.f32 %v301, 1.442695
      %v308 = vpow.pop %v307
      %v309 = vmul.f32 %v302, 1.442695
      %v310 = vpow.pop %v309
      %v311 = vmul.f32 %v304, %v255
      %v312 = vmul.f32 %v306, %v256
      %v313 = vmul.f32 %v308, %v257
      %v314 = vmul.f32 %v310, %v258
      %v315 = vld [vmem:[#allocation3] sm:$0xff]
      %v316 = vld [vmem:[#allocation3 + $0x8] sm:$0xff]
      %v317 = vld [vmem:[#allocation3 + $0x10] sm:$0xff]
      %v318 = vld [vmem:[#allocation3 + $0x18] sm:$0xff]
      %v319 = vsub.f32 %v263, %v275
      %v320 = vsub.f32 %v264, %v276
      %v321 = vsub.f32 %v265, %v277
      %v322 = vsub.f32 %v266, %v278
      %v323 = vmul.f32 %v319, 1.442695
      %v324 = vpow.pop %v323
      %v325 = vmul.f32 %v320, 1.442695
      %v326 = vpow.pop %v325
      %v327 = vmul.f32 %v321, 1.442695
      %v328 = vpow.pop %v327
      %v329 = vmul.f32 %v322, 1.442695
      %v330 = vpow.pop %v329
      %v331 = vmul.f32 %v315, %v324
      %v332 = vmul.f32 %v316, %v326
      %v333 = vmul.f32 %v317, %v328
      %v334 = vmul.f32 %v318, %v330
      %335 = vadd.xlane.f32.xlu0 %v311
      %v336 = vpop.xlane.xlu0 %335
      %337 = vadd.xlane.f32.xlu0 %v312
      %v338 = vpop.xlane.xlu0 %337
      %339 = vadd.xlane.f32.xlu0 %v313
      %v340 = vpop.xlane.xlu0 %339
      %341 = vadd.xlane.f32.xlu0 %v314
      %v342 = vpop.xlane.xlu0 %341
      %v343 = vadd.f32 %v331, %v336
      %v344 = vadd.f32 %v332, %v338
      %v345 = vadd.f32 %v333, %v340
      %v346 = vadd.f32 %v334, %v342
      %vm347 = vcmask 7168
      %348 = vst.msk [vmem:[#allocation3] sm:$0xff] %vm347, %v343
      %349 = vst.msk [vmem:[#allocation3 + $0x8] sm:$0xff] %vm347, %v344
      %350 = vst.msk [vmem:[#allocation3 + $0x10] sm:$0xff] %vm347, %v345
      %351 = vst.msk [vmem:[#allocation3 + $0x18] sm:$0xff] %vm347, %v346
      %352 = vst.msk [vmem:[#allocation2] sm:$0xff] %vm347, %v275
      %353 = vst.msk [vmem:[#allocation2 + $0x8] sm:$0xff] %vm347, %v276
      %354 = vst.msk [vmem:[#allocation2 + $0x10] sm:$0xff] %vm347, %v277
      %355 = vst.msk [vmem:[#allocation2 + $0x18] sm:$0xff] %vm347, %v278
      %v356 = vld [vmem:[#allocation4] sm:$0xff]
      %v357 = vld [vmem:[#allocation4 + $0x8] sm:$0xff]
      %v358 = vld [vmem:[#allocation4 + $0x10] sm:$0xff]
      %v359 = vld [vmem:[#allocation4 + $0x18] sm:$0xff]
      %v360 = vmul.f32 %v259, %v202
      %v361 = vmul.f32 %v260, %v205
      %v362 = vmul.f32 %v261, %v210
      %v363 = vmul.f32 %v262, %v213
      %364 = vadd.xlane.f32.xlu0 %v360
      %v365 = vpop.xlane.xlu0 %364
      %366 = vadd.xlane.f32.xlu0 %v361
      %v367 = vpop.xlane.xlu0 %366
      %368 = vadd.xlane.f32.xlu0 %v362
      %v369 = vpop.xlane.xlu0 %368
      %370 = vadd.xlane.f32.xlu0 %v363
      %v371 = vpop.xlane.xlu0 %370
      %v372 = vadd.f32 %v356, %v365
      %v373 = vadd.f32 %v357, %v367
      %v374 = vadd.f32 %v358, %v369
      %v375 = vadd.f32 %v359, %v371
      %376 = vst.msk [vmem:[#allocation4] sm:$0xff] %vm347, %v372
      %377 = vst.msk [vmem:[#allocation4 + $0x8] sm:$0xff] %vm347, %v373
      %378 = vst.msk [vmem:[#allocation4 + $0x10] sm:$0xff] %vm347, %v374
      %379 = vst.msk [vmem:[#allocation4 + $0x18] sm:$0xff] %vm347, %v375
      %v380 = vld [vmem:[#allocation5] sm:$0xff]
      %v381 = vld [vmem:[#allocation5 + $0x8] sm:$0xff]
      %v382 = vld [vmem:[#allocation5 + $0x10] sm:$0xff]
      %v383 = vld [vmem:[#allocation5 + $0x18] sm:$0xff]
      %384 = vadd.xlane.f32.xlu0 %v259
      %v385 = vpop.xlane.xlu0 %384
      %386 = vadd.xlane.f32.xlu0 %v260
      %v387 = vpop.xlane.xlu0 %386
      %388 = vadd.xlane.f32.xlu0 %v261
      %v389 = vpop.xlane.xlu0 %388
      %390 = vadd.xlane.f32.xlu0 %v262
      %v391 = vpop.xlane.xlu0 %390
      %v392 = vadd.f32 %v380, %v385
      %v393 = vadd.f32 %v381, %v387
      %v394 = vadd.f32 %v382, %v389
      %v395 = vadd.f32 %v383, %v391
      %396 = vst.msk [vmem:[#allocation5] sm:$0xff] %vm347, %v392
      %397 = vst.msk [vmem:[#allocation5 + $0x8] sm:$0xff] %vm347, %v393
      %398 = vst.msk [vmem:[#allocation5 + $0x10] sm:$0xff] %vm347, %v394
      %399 = vst.msk [vmem:[#allocation5 + $0x18] sm:$0xff] %vm347, %v395
    $region29: #{tpu_custom_call.1} parent=1 // pred_fallthru
      _
    %p400 = pneg %p224
    // Predicated region
    $region30: #{tpu_custom_call.1} parent=1 // pred_check
      _
    $region31: #{tpu_custom_call.1} parent=1 // pred_check_branch
      %402 = sbr.rel (%p224) target = $region33
    $region32: #{tpu_custom_call.1} parent=1 // pred_region
      %v403 = vld [vmem:[#allocation2] sm:$0xff]
      %v404 = vld [vmem:[#allocation2 + $0x8] sm:$0xff]
      %v405 = vld [vmem:[#allocation2 + $0x10] sm:$0xff]
      %v406 = vld [vmem:[#allocation2 + $0x18] sm:$0xff]
      %407 = vmax.xlane.f32.xlu0 %v202
      %v408 = vpop.xlane.xlu0 %407
      %409 = vmax.xlane.f32.xlu0 %v205
      %v410 = vpop.xlane.xlu0 %409
      %411 = vmax.xlane.f32.xlu0 %v210
      %v412 = vpop.xlane.xlu0 %411
      %413 = vmax.xlane.f32.xlu0 %v213
      %v414 = vpop.xlane.xlu0 %413
      %v415 = vmax.f32 %v403, %v408
      %v416 = vmax.f32 %v404, %v410
      %v417 = vmax.f32 %v405, %v412
      %v418 = vmax.f32 %v406, %v414
      %420 = vset.pattern.permute.xlu0 0
      %421 = vperm.xlu0 %420, %v415
      %v422 = vpop.permute.xlu0 %421
      %425 = vset.pattern.permute.xlu0 0
      %426 = vperm.xlu0 %425, %v416
      %v427 = vpop.permute.xlu0 %426
      %430 = vset.pattern.permute.xlu0 0
      %431 = vperm.xlu0 %430, %v417
      %v432 = vpop.permute.xlu0 %431
      %435 = vset.pattern.permute.xlu0 0
      %436 = vperm.xlu0 %435, %v418
      %v437 = vpop.permute.xlu0 %436
      %v439 = vsub.f32 %v202, %v422
      %v440 = vsub.f32 %v205, %v427
      %v441 = vsub.f32 %v210, %v432
      %v442 = vsub.f32 %v213, %v437
      %v443 = vmul.f32 %v439, 1.442695
      %v444 = vpow.pop %v443
      %v445 = vmul.f32 %v440, 1.442695
      %v446 = vpow.pop %v445
      %v447 = vmul.f32 %v441, 1.442695
      %v448 = vpow.pop %v447
      %v449 = vmul.f32 %v442, 1.442695
      %v450 = vpow.pop %v449
      %v451 = vld [vmem:[#allocation3] sm:$0xff]
      %v452 = vld [vmem:[#allocation3 + $0x8] sm:$0xff]
      %v453 = vld [vmem:[#allocation3 + $0x10] sm:$0xff]
      %v454 = vld [vmem:[#allocation3 + $0x18] sm:$0xff]
      %v455 = vsub.f32 %v403, %v415
      %v456 = vsub.f32 %v404, %v416
      %v457 = vsub.f32 %v405, %v417
      %v458 = vsub.f32 %v406, %v418
      %v459 = vmul.f32 %v455, 1.442695
      %v460 = vpow.pop %v459
      %v461 = vmul.f32 %v456, 1.442695
      %v462 = vpow.pop %v461
      %v463 = vmul.f32 %v457, 1.442695
      %v464 = vpow.pop %v463
      %v465 = vmul.f32 %v458, 1.442695
      %v466 = vpow.pop %v465
      %v467 = vmul.f32 %v451, %v460
      %v468 = vmul.f32 %v452, %v462
      %v469 = vmul.f32 %v453, %v464
      %v470 = vmul.f32 %v454, %v466
      %471 = vadd.xlane.f32.xlu0 %v444
      %v472 = vpop.xlane.xlu0 %471
      %473 = vadd.xlane.f32.xlu0 %v446
      %v474 = vpop.xlane.xlu0 %473
      %475 = vadd.xlane.f32.xlu0 %v448
      %v476 = vpop.xlane.xlu0 %475
      %477 = vadd.xlane.f32.xlu0 %v450
      %v478 = vpop.xlane.xlu0 %477
      %v479 = vadd.f32 %v467, %v472
      %v480 = vadd.f32 %v468, %v474
      %v481 = vadd.f32 %v469, %v476
      %v482 = vadd.f32 %v470, %v478
      %vm483 = vcmask 7168
      %484 = vst.msk [vmem:[#allocation3] sm:$0xff] %vm483, %v479
      %485 = vst.msk [vmem:[#allocation3 + $0x8] sm:$0xff] %vm483, %v480
      %486 = vst.msk [vmem:[#allocation3 + $0x10] sm:$0xff] %vm483, %v481
      %487 = vst.msk [vmem:[#allocation3 + $0x18] sm:$0xff] %vm483, %v482
      %488 = vst.msk [vmem:[#allocation2] sm:$0xff] %vm483, %v415
      %489 = vst.msk [vmem:[#allocation2 + $0x8] sm:$0xff] %vm483, %v416
      %490 = vst.msk [vmem:[#allocation2 + $0x10] sm:$0xff] %vm483, %v417
      %491 = vst.msk [vmem:[#allocation2 + $0x18] sm:$0xff] %vm483, %v418
      %v492 = vld [vmem:[#allocation4] sm:$0xff]
      %v493 = vld [vmem:[#allocation4 + $0x8] sm:$0xff]
      %v494 = vld [vmem:[#allocation4 + $0x10] sm:$0xff]
      %v495 = vld [vmem:[#allocation4 + $0x18] sm:$0xff]
      %v496 = vmul.f32 %v62, %v202
      %v497 = vmul.f32 %v63, %v205
      %v498 = vmul.f32 %v64, %v210
      %v499 = vmul.f32 %v65, %v213
      %500 = vadd.xlane.f32.xlu0 %v496
      %v501 = vpop.xlane.xlu0 %500
      %502 = vadd.xlane.f32.xlu0 %v497
      %v503 = vpop.xlane.xlu0 %502
      %504 = vadd.xlane.f32.xlu0 %v498
      %v505 = vpop.xlane.xlu0 %504
      %506 = vadd.xlane.f32.xlu0 %v499
      %v507 = vpop.xlane.xlu0 %506
      %v508 = vadd.f32 %v492, %v501
      %v509 = vadd.f32 %v493, %v503
      %v510 = vadd.f32 %v494, %v505
      %v511 = vadd.f32 %v495, %v507
      %512 = vst.msk [vmem:[#allocation4] sm:$0xff] %vm483, %v508
      %513 = vst.msk [vmem:[#allocation4 + $0x8] sm:$0xff] %vm483, %v509
      %514 = vst.msk [vmem:[#allocation4 + $0x10] sm:$0xff] %vm483, %v510
      %515 = vst.msk [vmem:[#allocation4 + $0x18] sm:$0xff] %vm483, %v511
      %v516 = vld [vmem:[#allocation5] sm:$0xff]
      %v517 = vld [vmem:[#allocation5 + $0x8] sm:$0xff]
      %v518 = vld [vmem:[#allocation5 + $0x10] sm:$0xff]
      %v519 = vld [vmem:[#allocation5 + $0x18] sm:$0xff]
      %520 = vadd.xlane.f32.xlu0 %v62
      %v521 = vpop.xlane.xlu0 %520
      %522 = vadd.xlane.f32.xlu0 %v63
      %v523 = vpop.xlane.xlu0 %522
      %524 = vadd.xlane.f32.xlu0 %v64
      %v525 = vpop.xlane.xlu0 %524
      %526 = vadd.xlane.f32.xlu0 %v65
      %v527 = vpop.xlane.xlu0 %526
      %v528 = vadd.f32 %v516, %v521
      %v529 = vadd.f32 %v517, %v523
      %v530 = vadd.f32 %v518, %v525
      %v531 = vadd.f32 %v519, %v527
      %532 = vst.msk [vmem:[#allocation5] sm:$0xff] %vm483, %v528
      %533 = vst.msk [vmem:[#allocation5 + $0x8] sm:$0xff] %vm483, %v529
      %534 = vst.msk [vmem:[#allocation5 + $0x10] sm:$0xff] %vm483, %v530
      %535 = vst.msk [vmem:[#allocation5 + $0x18] sm:$0xff] %vm483, %v531
    $region33: #{tpu_custom_call.1} parent=1 // pred_fallthru
      _
    // Predicated region
    $region34: #{tpu_custom_call.1} parent=1 // pred_check
      %p536 = pneg %p66
    $region35: #{tpu_custom_call.1} parent=1 // pred_check_branch
      %538 = sbr.rel (%p536) target = $region37
    $region36: #{tpu_custom_call.1} parent=1 // pred_region
      %v539 = vld [vmem:[#allocation5] sm:$0xff]
      %v540 = vld [vmem:[#allocation5 + $0x8] sm:$0xff]
      %v541 = vld [vmem:[#allocation5 + $0x10] sm:$0xff]
      %v542 = vld [vmem:[#allocation5 + $0x18] sm:$0xff]
      %v543 = vld [vmem:[#allocation4] sm:$0xff]
      %v544 = vld [vmem:[#allocation4 + $0x8] sm:$0xff]
      %v545 = vld [vmem:[#allocation4 + $0x10] sm:$0xff]
      %v546 = vld [vmem:[#allocation4 + $0x18] sm:$0xff]
      %v547 = vld [vmem:[#allocation2] sm:$0xff]
      %v548 = vld [vmem:[#allocation2 + $0x8] sm:$0xff]
      %v549 = vld [vmem:[#allocation2 + $0x10] sm:$0xff]
      %v550 = vld [vmem:[#allocation2 + $0x18] sm:$0xff]
      %v551 = vld [vmem:[#allocation3] sm:$0xff]
      %v552 = vld [vmem:[#allocation3 + $0x8] sm:$0xff]
      %v553 = vld [vmem:[#allocation3 + $0x10] sm:$0xff]
      %v554 = vld [vmem:[#allocation3 + $0x18] sm:$0xff]
      %v555 = vlog2.pop %v551
      %v556 = vmul.f32 %v555, 0.6931472
      %v557 = vlog2.pop %v552
      %v558 = vmul.f32 %v557, 0.6931472
      %v559 = vlog2.pop %v553
      %v560 = vmul.f32 %v559, 0.6931472
      %v561 = vlog2.pop %v554
      %v562 = vmul.f32 %v561, 0.6931472
      %v563 = vadd.f32 %v547, %v556
      %v564 = vadd.f32 %v548, %v558
      %v565 = vadd.f32 %v549, %v560
      %v566 = vadd.f32 %v550, %v562
      %v567 = vmul.f32 %v539, %v563
      %v568 = vmul.f32 %v540, %v564
      %v569 = vmul.f32 %v541, %v565
      %v570 = vmul.f32 %v542, %v566
      %v571 = vsub.f32 %v543, %v567
      %v572 = vsub.f32 %v544, %v568
      %v573 = vsub.f32 %v545, %v569
      %v574 = vsub.f32 %v546, %v570
      %v575 = vrcp.pop %v539
      %v576 = vmul.f32 %v571, %v575
      %v577 = vrcp.pop %v540
      %v578 = vmul.f32 %v572, %v577
      %v579 = vrcp.pop %v541
      %v580 = vmul.f32 %v573, %v579
      %v581 = vrcp.pop %v542
      %v582 = vmul.f32 %v574, %v581
      %v583 = vmul.f32 %v576, -1.0
      %v584 = vmul.f32 %v578, -1.0
      %v585 = vmul.f32 %v580, -1.0
      %v586 = vmul.f32 %v582, -1.0
      %588 = vset.pattern.permute.xlu0 0
      %589 = vperm.xlu0 %588, %v583
      %v590 = vpop.permute.xlu0 %589
      %593 = vset.pattern.permute.xlu0 0
      %594 = vperm.xlu0 %593, %v584
      %v595 = vpop.permute.xlu0 %594
      %598 = vset.pattern.permute.xlu0 0
      %599 = vperm.xlu0 %598, %v585
      %v600 = vpop.permute.xlu0 %599
      %603 = vset.pattern.permute.xlu0 0
      %604 = vperm.xlu0 %603, %v586
      %v605 = vpop.permute.xlu0 %604
      %607 = vst [vmem:[#allocation9] sm:$0xff] %v590
      %608 = vst [vmem:[#allocation9 + $0x8] sm:$0xff] %v595
      %609 = vst [vmem:[#allocation9 + $0x10] sm:$0xff] %v600
      %610 = vst [vmem:[#allocation9 + $0x18] sm:$0xff] %v605
    $region37: #{tpu_custom_call.1} parent=1 // pred_fallthru
      _
    // Predicated region
    $region38: #{tpu_custom_call.1} parent=1 // pred_check
      _
    $region39: #{tpu_custom_call.1} parent=1 // pred_check_branch
      %612 = sbr.rel (0) target = $region41
    $region40: #{tpu_custom_call.1} parent=1 // pred_region
      %s614 = ssub.s32 512, 512
      %615 = vsyncadd [#allocation8], %s614
      %s616 = sshll.u32 [#allocation9], 4
      %s617 = int_to_ptr.vmem [resolvable:$true] %s616
      %622 = dma.vmem_to_hbm [thread:$0]  %s617, 512, %s4, [#allocation8], 128, 128, 8
    $region41: #{tpu_custom_call.1} parent=1 // pred_fallthru
      _
    // Predicated region
    $region42: #{tpu_custom_call.1} parent=1 // pred_check
      _
    $region43: #{tpu_custom_call.1} parent=1 // pred_check_branch
      %624 = sbr.rel (0) target = $region45
    $region44: #{tpu_custom_call.1} parent=1 // pred_region
      %625 = dma.done [#allocation8], 512
    $region45: #{tpu_custom_call.1} parent=1 // pred_fallthru
      _
    %626 = vsyncpa [#allocation7], 1
    %627 = vsyncpa [#allocation8], 1

</llo_original>
